<compile_context>
chip_gen: v7x
topology: tpu7x:2x2x1
jax: 0.10.0
libtpu: 0.0.40
codegen_flags: <defaults>
</compile_context>

<pallas_src>
import functools

import jax
import jax.numpy as jnp
from jax import lax
from jax.experimental import pallas as pl
from jax.experimental.pallas import tpu as pltpu

N_USERS = 64
N_ITEMS = 128
N_FACTORS = 32    # "hidden" size (n_factors)
N_CLASSES = 5     # Linear(n_factors, 5) in mode 'ce'
CLS_PAD = 8       # classes padded to one sublane group


def _round_up(x, m):
    return ((x + m - 1) // m) * m


def _mf_ce_kernel(uid_ref, iid_ref, tabT_ref, w8_ref, b8_ref, o_ref, *, n_users):
    # uid_ref, iid_ref : (1, TB)                 int32 row ids (lane-major)
    # tabT_ref         : (2F, n_users+n_items)   block-diag transposed tables
    #                     rows [0:F)  = user_factors.T in cols [0:n_users)
    #                     rows [F:2F) = item_factors.T in cols [n_users:)
    # w8_ref           : (8, F)                  Linear weight, sublane-padded
    # b8_ref           : (8, 1)                  Linear bias,  sublane-padded
    # o_ref            : (8, TB)                 transposed padded scores
    tb = uid_ref.shape[1]
    n_tot = tabT_ref.shape[1]
    f = tabT_ref.shape[0] // 2

    uid = uid_ref[...]                                            # (1, TB)
    iid = iid_ref[...]                                            # (1, TB)

    # Combined transposed one-hot: row r selects user r (r < n_users) or
    # item r - n_users (r >= n_users).  One K = n_tot MXU pass gathers both
    # embeddings at once (block-diagonal table).
    row = lax.broadcasted_iota(jnp.int32, (n_tot, tb), 0)         # (n_tot, TB)
    target = jnp.where(row < n_users, uid, iid + n_users)         # (n_tot, TB)
    onehot_t = (row == target).astype(jnp.float32)                # (n_tot, TB)

    emb_t = jnp.dot(tabT_ref[...], onehot_t,
                    preferred_element_type=jnp.float32)           # (2F, TB)
    prod_t = emb_t[:f, :] * emb_t[f:, :]                          # (F, TB) VPU
    scores_t = jnp.dot(w8_ref[...], prod_t,
                       preferred_element_type=jnp.float32)        # (8, TB)
    o_ref[...] = scores_t + b8_ref[...]                           # unmasked vst


def mf_forward_ce(user_ids, item_ids, user_factors, item_factors, w, b,
                  *, batch_tile=2048):
    """Forward pass of MatrixFactorization in mode='ce'.

    user_ids, item_ids: int32 [B]
    user_factors: [n_users, F], item_factors: [n_items, F]
    w: [5, F] (PyTorch nn.Linear layout), b: [5]
    returns: [B, 5] float32 scores (pre-softmax, matching module.forward)
    """
    B = int(user_ids.shape[0])
    n_users, F = user_factors.shape
    n_items, _ = item_factors.shape
    n_tot = n_users + n_items

    # Tile sizing: lane-dense tiles (multiples of 128).  For large single-tile
    # batches, split in two so v7x's two TensorCores both get work.
    tb = min(batch_tile, _round_up(B, 128))
    if tb >= 256 and _round_up(B, tb) == tb:
        tb = _round_up(tb // 2, 128)
    B_pad = _round_up(B, tb)

    uid = user_ids.astype(jnp.int32)
    iid = item_ids.astype(jnp.int32)
    if B_pad != B:
        pad = B_pad - B
        uid = jnp.concatenate([uid, jnp.zeros((pad,), jnp.int32)])
        iid = jnp.concatenate([iid, jnp.zeros((pad,), jnp.int32)])
    uid2 = uid.reshape(1, B_pad)   # lane-major ids
    iid2 = iid.reshape(1, B_pad)

    # Block-diagonal transposed factor table: [ufT | 0 ; 0 | ifT]  -> (2F, n_tot)
    tab_t = jnp.zeros((2 * F, n_tot), jnp.float32)
    tab_t = tab_t.at[:F, :n_users].set(jnp.transpose(user_factors).astype(jnp.float32))
    tab_t = tab_t.at[F:, n_users:].set(jnp.transpose(item_factors).astype(jnp.float32))

    # Linear params, sublane-padded to 8 output rows (rows 5..7 are zero).
    w8 = jnp.zeros((CLS_PAD, F), jnp.float32).at[:N_CLASSES, :].set(w.astype(jnp.float32))
    b8 = jnp.zeros((CLS_PAD, 1), jnp.float32).at[:N_CLASSES, 0].set(b.astype(jnp.float32))

    grid = (B_pad // tb,)
    kernel = functools.partial(_mf_ce_kernel, n_users=n_users)
    out_t = pl.pallas_call(
        kernel,
        out_shape=jax.ShapeDtypeStruct((CLS_PAD, B_pad), jnp.float32),
        grid_spec=pltpu.PrefetchScalarGridSpec(
            num_scalar_prefetch=0,
            grid=grid,
            in_specs=[
                pl.BlockSpec((1, tb), lambda i: (0, i)),            # user ids
                pl.BlockSpec((1, tb), lambda i: (0, i)),            # item ids
                pl.BlockSpec((2 * F, n_tot), lambda i: (0, 0)),     # block-diag tables^T
                pl.BlockSpec((CLS_PAD, F), lambda i: (0, 0)),       # W (padded)
                pl.BlockSpec((CLS_PAD, 1), lambda i: (0, 0)),       # bias (padded)
            ],
            out_specs=pl.BlockSpec((CLS_PAD, tb), lambda i: (0, i)),
        ),
        compiler_params=pltpu.CompilerParams(
            dimension_semantics=("parallel",)),
    )(uid2, iid2, tab_t, w8, b8)

    # (8, B_pad) -> (B, 5); padded tail / padded classes are discarded here.
    return jnp.transpose(out_t[:N_CLASSES, :B])


def _init_params(key):
    """Deterministic parameter init (shapes match the PyTorch module, mode='ce')."""
    k_uf, k_if, k_w, k_b = jax.random.split(key, 4)
    # xavier_normal_ for the embeddings: std = sqrt(2 / (fan_in + fan_out))
    std_u = jnp.sqrt(2.0 / (N_USERS + N_FACTORS))
    user_factors = std_u * jax.random.normal(k_uf, (N_USERS, N_FACTORS), jnp.float32)
    std_i = jnp.sqrt(2.0 / (N_ITEMS + N_FACTORS))
    item_factors = std_i * jax.random.normal(k_if, (N_ITEMS, N_FACTORS), jnp.float32)
    # nn.Linear(n_factors, 5) default-style init (uniform in +-1/sqrt(fan_in))
    bound = 1.0 / jnp.sqrt(jnp.float32(N_FACTORS))
    w = jax.random.uniform(k_w, (N_CLASSES, N_FACTORS), jnp.float32, -bound, bound)
    b = jax.random.uniform(k_b, (N_CLASSES,), jnp.float32, -bound, bound)
    return user_factors, item_factors, w, b


if __name__ == "__main__":
    key = jax.random.PRNGKey(0)
    k_params, k_u, k_i = jax.random.split(key, 3)

    user_factors, item_factors, w, b = _init_params(k_params)

    B = 16
    user_ids = jax.random.randint(k_u, (B,), 0, N_USERS, dtype=jnp.int32)
    item_ids = jax.random.randint(k_i, (B,), 0, N_ITEMS, dtype=jnp.int32)

    scores = mf_forward_ce(user_ids, item_ids, user_factors, item_factors, w, b)
    scores = jax.block_until_ready(scores)

    # Pure-JAX reference check.
    ref = (jnp.take(user_factors, user_ids, 0) *
           jnp.take(item_factors, item_ids, 0)) @ w.T + b
    assert scores.shape == (B, N_CLASSES)
    assert jnp.allclose(scores, ref, atol=1e-5, rtol=1e-5)

    # TODO(synk): 'mse'/'bce' modes (dot-product score + global/user/item offset
    # biases) are not implemented; the module default mode='ce' is what forward
    # returns here.
    print("KERNEL_OK")
</pallas_src>

<mosaic_0001>
module attributes {stable_mosaic.version = 11 : i64} {
  func.func @_mf_ce_kernel(%arg0: i32, %arg1: memref<1x128xi32, #tpu.memory_space<vmem>>, %arg2: memref<1x128xi32, #tpu.memory_space<vmem>>, %arg3: memref<64x192xf32, #tpu.memory_space<vmem>>, %arg4: memref<8x32xf32, #tpu.memory_space<vmem>>, %arg5: memref<8x1xf32, #tpu.memory_space<vmem>>, %arg6: memref<8x128xf32, #tpu.memory_space<vmem>>) attributes {dimension_semantics = [#tpu.dimension_semantics<parallel>], iteration_bounds = array<i64: 1>, scalar_prefetch = 0 : i64, scratch_operands = 0 : i64, tpu.core_type = #tpu.core_type<tc>, window_params = [{transform_indices = @transform_0, window_bounds = array<i64: 1, 128>}, {transform_indices = @transform_1, window_bounds = array<i64: 1, 128>}, {pipeline_mode = #tpu.pipeline_mode<synchronous>, transform_indices = @transform_2, window_bounds = array<i64: 64, 192>}, {pipeline_mode = #tpu.pipeline_mode<synchronous>, transform_indices = @transform_3, window_bounds = array<i64: 8, 32>}, {pipeline_mode = #tpu.pipeline_mode<synchronous>, transform_indices = @transform_4, window_bounds = array<i64: 8, 1>}, {transform_indices = @transform_5, window_bounds = array<i64: 8, 128>}]} {
    %c0 = arith.constant 0 : index
    %c0_0 = arith.constant 0 : index
    %0 = vector.load %arg1[%c0, %c0_0] : memref<1x128xi32, #tpu.memory_space<vmem>>, vector<1x128xi32>
    %c0_1 = arith.constant 0 : index
    %c0_2 = arith.constant 0 : index
    %1 = vector.load %arg2[%c0_1, %c0_2] : memref<1x128xi32, #tpu.memory_space<vmem>>, vector<1x128xi32>
    %2 = tpu.iota {dimensions = array<i32: 0>} : vector<192x128xi32>
    %c64_i32 = arith.constant 64 : i32
    %3 = vector.broadcast %c64_i32 : i32 to vector<192x128xi32>
    %4 = arith.cmpi slt, %2, %3 : vector<192x128xi32>
    %c64_i32_3 = arith.constant 64 : i32
    %5 = vector.broadcast %c64_i32_3 : i32 to vector<1x128xi32>
    %6 = arith.addi %1, %5 : vector<1x128xi32>
    %7 = vector.shape_cast %0 : vector<1x128xi32> to vector<1x128xi32>
    %8 = vector.broadcast %7 : vector<1x128xi32> to vector<192x128xi32>
    %9 = vector.shape_cast %6 : vector<1x128xi32> to vector<1x128xi32>
    %10 = vector.broadcast %9 : vector<1x128xi32> to vector<192x128xi32>
    %11 = arith.select %4, %8, %10 : vector<192x128xi1>, vector<192x128xi32>
    %12 = arith.cmpi eq, %2, %11 : vector<192x128xi32>
    %13 = arith.extui %12 : vector<192x128xi1> to vector<192x128xi32>
    %14 = arith.sitofp %13 : vector<192x128xi32> to vector<192x128xf32>
    %c0_4 = arith.constant 0 : index
    %c0_5 = arith.constant 0 : index
    %15 = vector.load %arg3[%c0_4, %c0_5] : memref<64x192xf32, #tpu.memory_space<vmem>>, vector<64x192xf32>
    %cst = arith.constant dense<0.000000e+00> : vector<64x128xf32>
    %16 = tpu.matmul %15, %14, %cst {dimension_numbers = #tpu.dot_dimension_numbers<[1], [0], [0], [1], [0, 0, 1, 1], [], []>} : vector<64x192xf32>, vector<192x128xf32>, vector<64x128xf32> -> vector<64x128xf32>
    %17 = vector.extract_strided_slice %16 {offsets = [0, 0], sizes = [32, 128], strides = [1, 1]} : vector<64x128xf32> to vector<32x128xf32>
    %18 = vector.extract_strided_slice %16 {offsets = [32, 0], sizes = [32, 128], strides = [1, 1]} : vector<64x128xf32> to vector<32x128xf32>
    %19 = arith.mulf %17, %18 : vector<32x128xf32>
    %c0_6 = arith.constant 0 : index
    %c0_7 = arith.constant 0 : index
    %20 = vector.load %arg4[%c0_6, %c0_7] : memref<8x32xf32, #tpu.memory_space<vmem>>, vector<8x32xf32>
    %cst_8 = arith.constant dense<0.000000e+00> : vector<8x128xf32>
    %21 = tpu.matmul %20, %19, %cst_8 {dimension_numbers = #tpu.dot_dimension_numbers<[1], [0], [0], [1], [0, 0, 1, 1], [], []>} : vector<8x32xf32>, vector<32x128xf32>, vector<8x128xf32> -> vector<8x128xf32>
    %c0_9 = arith.constant 0 : index
    %c0_10 = arith.constant 0 : index
    %22 = vector.load %arg5[%c0_9, %c0_10] : memref<8x1xf32, #tpu.memory_space<vmem>>, vector<8x1xf32>
    %23 = vector.broadcast %22 : vector<8x1xf32> to vector<8x128xf32>
    %24 = arith.addf %21, %23 : vector<8x128xf32>
    %c0_11 = arith.constant 0 : index
    %c0_12 = arith.constant 0 : index
    %25 = vector.load %arg6[%c0_11, %c0_12] : memref<8x128xf32, #tpu.memory_space<vmem>>, vector<8x128xf32>
    tpu.vector_store %arg6[%c0_11, %c0_12], %24 {strides = array<i32>} : memref<8x128xf32, #tpu.memory_space<vmem>>, vector<8x128xf32>,
    return
  }
  func.func @transform_0(%arg0: i32) -> (i32, i32) {
    %c0_i32 = arith.constant 0 : i32
    %c0_i32_0 = arith.constant 0 : i32
    return %c0_i32, %arg0 : i32, i32
  }
  func.func @transform_1(%arg0: i32) -> (i32, i32) {
    %c0_i32 = arith.constant 0 : i32
    %c0_i32_0 = arith.constant 0 : i32
    return %c0_i32, %arg0 : i32, i32
  }
  func.func @transform_2(%arg0: i32) -> (i32, i32) {
    %c0_i32 = arith.constant 0 : i32
    %c0_i32_0 = arith.constant 0 : i32
    %c0_i32_1 = arith.constant 0 : i32
    return %c0_i32, %c0_i32_0 : i32, i32
  }
  func.func @transform_3(%arg0: i32) -> (i32, i32) {
    %c0_i32 = arith.constant 0 : i32
    %c0_i32_0 = arith.constant 0 : i32
    %c0_i32_1 = arith.constant 0 : i32
    return %c0_i32, %c0_i32_0 : i32, i32
  }
  func.func @transform_4(%arg0: i32) -> (i32, i32) {
    %c0_i32 = arith.constant 0 : i32
    %c0_i32_0 = arith.constant 0 : i32
    %c0_i32_1 = arith.constant 0 : i32
    return %c0_i32, %c0_i32_0 : i32, i32
  }
  func.func @transform_5(%arg0: i32) -> (i32, i32) {
    %c0_i32 = arith.constant 0 : i32
    %c0_i32_0 = arith.constant 0 : i32
    return %c0_i32, %arg0 : i32, i32
  }
}

</mosaic_0001>

<llo_original>
// kernel: tpu_custom_call.1
$region0: #{tpu_custom_call.1}
  #allocation0 [shape = 'u32[]', space=smem, size = 0x4, offset = 0x4, fixed_abs, tag = 'smem constant byte address 0x4 - core index']
  #allocation1 [shape = 'u32[144,128]{1,0:T(1,128)}', space=vmem, size = 0x12000, scoped, tag = 'internal scratch']
  %s0 = inlined_call_operand.vmem [shape: s32[1,128], index: 0, kind: input, shape index: {}]
  %s1 = inlined_call_operand.vmem [shape: s32[1,128], index: 1, kind: input, shape index: {}]
  %s2 = inlined_call_operand.hbm [shape: f32[64,192], index: 2, kind: input, shape index: {}]
  %s3 = inlined_call_operand.vmem [shape: f32[8,32], index: 3, kind: input, shape index: {}]
  %s4 = inlined_call_operand.vmem [shape: f32[8,1], index: 4, kind: input, shape index: {}]
  %s5 = inlined_call_operand.hbm [shape: f32[8,128], index: 5, kind: output, shape index: {}]
  %s6 = sld [smem:[#allocation0]]
  $region34: #{tpu_custom_call.1} parent=0
    _
  %s8 = ssub.s32 1, %s6
  %s9 = scalar_select 0, %s8, %s6
  $region1: #{tpu_custom_call.1} parent=0
    #allocation2 [shape = 'u8[65536]{0}', space=vmem, size = 0x10000, scoped, tag = 'input window, operand 2, single buffered']
    #allocation3 [shape = 's32[1]{0}', space=sflag, size = 0x4, scoped, tag = 'scoped memory for tpu_custom_call.1']
    #allocation4 [shape = 's32[1]{0}', space=sflag, size = 0x4, scoped, tag = 'scoped memory for tpu_custom_call.1']
    #allocation5 [shape = 'u8[4096]{0}', space=vmem, size = 0x1000, scoped, tag = 'output window, operand 0, single buffered']
    %10 = vsyncpa [#allocation3], 0
    %11 = vsyncpa [#allocation4], 0
    // Predicated region
    $region2: #{tpu_custom_call.1} parent=1 // pred_check
      _
    $region3: #{tpu_custom_call.1} parent=1 // pred_check_branch
      %13 = sbr.rel (0) target = $region5
    $region4: #{tpu_custom_call.1} parent=1 // pred_region
      _
    $region5: #{tpu_custom_call.1} parent=1 // pred_fallthru
      _
    // Predicated region
    $region6: #{tpu_custom_call.1} parent=1 // pred_check
      _
    $region7: #{tpu_custom_call.1} parent=1 // pred_check_branch
      %15 = sbr.rel (0) target = $region9
    $region8: #{tpu_custom_call.1} parent=1 // pred_region
      _
    $region9: #{tpu_custom_call.1} parent=1 // pred_fallthru
      _
    // Predicated region
    $region10: #{tpu_custom_call.1} parent=1 // pred_check
      _
    $region11: #{tpu_custom_call.1} parent=1 // pred_check_branch
      %17 = sbr.rel (0) target = $region13
    $region12: #{tpu_custom_call.1} parent=1 // pred_region
      %s19 = ssub.s32 2048, 2048
      %20 = vsyncadd [#allocation3], %s19
      %s21 = sshll.u32 [#allocation2], 4
      %s22 = int_to_ptr.vmem [resolvable:$true] %s21
      %27 = dma.hbm_to_vmem [thread:$0]  %s2, 2048, %s22, [#allocation3], 256, 256, 16
    $region13: #{tpu_custom_call.1} parent=1 // pred_fallthru
      _
    // Predicated region
    $region14: #{tpu_custom_call.1} parent=1 // pred_check
      _
    $region15: #{tpu_custom_call.1} parent=1 // pred_check_branch
      %29 = sbr.rel (0) target = $region17
    $region16: #{tpu_custom_call.1} parent=1 // pred_region
      _
    $region17: #{tpu_custom_call.1} parent=1 // pred_fallthru
      _
    // Predicated region
    $region18: #{tpu_custom_call.1} parent=1 // pred_check
      _
    $region19: #{tpu_custom_call.1} parent=1 // pred_check_branch
      %31 = sbr.rel (0) target = $region21
    $region20: #{tpu_custom_call.1} parent=1 // pred_region
      _
    $region21: #{tpu_custom_call.1} parent=1 // pred_fallthru
      _
    // Predicated region
    $region22: #{tpu_custom_call.1} parent=1 // pred_check
      _
    $region23: #{tpu_custom_call.1} parent=1 // pred_check_branch
      %33 = sbr.rel (0) target = $region25
    $region24: #{tpu_custom_call.1} parent=1 // pred_region
      %34 = dma.done [#allocation3], 2048
    $region25: #{tpu_custom_call.1} parent=1 // pred_fallthru
      _
    %v35 = vld [vmem:[%s0] sm:$0x1]
    %v36 = vld [vmem:[%s1] sm:$0x1]
    %v37 = vlaneseq
    %v38 = vshrl.u32 %v37, 7
    %v39 = vadd.s32 %v38, 8
    %v40 = vadd.s32 %v38, 16
    %v41 = vadd.s32 %v38, 24
    %v42 = vadd.s32 %v38, 32
    %v43 = vadd.s32 %v38, 40
    %v44 = vadd.s32 %v38, 48
    %v45 = vadd.s32 %v38, 56
    %v46 = vadd.s32 %v38, 64
    %v47 = vadd.s32 %v38, 72
    %v48 = vadd.s32 %v38, 80
    %v49 = vadd.s32 %v38, 88
    %v50 = vadd.s32 %v38, 96
    %v51 = vadd.s32 %v38, 104
    %v52 = vadd.s32 %v38, 112
    %v53 = vadd.s32 %v38, 120
    %v54 = vadd.s32 %v38, 128
    %v55 = vadd.s32 %v38, 136
    %v56 = vadd.s32 %v38, 144
    %v57 = vadd.s32 %v38, 152
    %v58 = vadd.s32 %v38, 160
    %v59 = vadd.s32 %v38, 168
    %v60 = vadd.s32 %v38, 176
    %v61 = vadd.s32 %v38, 184
    %vm62 = vcmp.lt.s32.totalorder %v38, 64
    %vm63 = vcmp.lt.s32.totalorder %v39, 64
    %vm64 = vcmp.lt.s32.totalorder %v40, 64
    %vm65 = vcmp.lt.s32.totalorder %v41, 64
    %vm66 = vcmp.lt.s32.totalorder %v42, 64
    %vm67 = vcmp.lt.s32.totalorder %v43, 64
    %vm68 = vcmp.lt.s32.totalorder %v44, 64
    %vm69 = vcmp.lt.s32.totalorder %v45, 64
    %vm70 = vcmp.lt.s32.totalorder %v46, 64
    %vm71 = vcmp.lt.s32.totalorder %v47, 64
    %vm72 = vcmp.lt.s32.totalorder %v48, 64
    %vm73 = vcmp.lt.s32.totalorder %v49, 64
    %vm74 = vcmp.lt.s32.totalorder %v50, 64
    %vm75 = vcmp.lt.s32.totalorder %v51, 64
    %vm76 = vcmp.lt.s32.totalorder %v52, 64
    %vm77 = vcmp.lt.s32.totalorder %v53, 64
    %vm78 = vcmp.lt.s32.totalorder %v54, 64
    %vm79 = vcmp.lt.s32.totalorder %v55, 64
    %vm80 = vcmp.lt.s32.totalorder %v56, 64
    %vm81 = vcmp.lt.s32.totalorder %v57, 64
    %vm82 = vcmp.lt.s32.totalorder %v58, 64
    %vm83 = vcmp.lt.s32.totalorder %v59, 64
    %vm84 = vcmp.lt.s32.totalorder %v60, 64
    %vm85 = vcmp.lt.s32.totalorder %v61, 64
    %v86 = vadd.s32 %v36, 64
    %v87 = vlaneseq
    %v88 = vshrl.u32 %v87, 7
    %v89 = vsub.s32 0, %v88
    %v90 = vrot.slane %v35, %v89
    %v91 = vlaneseq
    %v92 = vshrl.u32 %v91, 7
    %v93 = vsub.s32 0, %v92
    %v94 = vrot.slane %v86, %v93
    %v95 = vsel %vm62, %v90, %v94
    %v96 = vsel %vm63, %v90, %v94
    %v97 = vsel %vm64, %v90, %v94
    %v98 = vsel %vm65, %v90, %v94
    %v99 = vsel %vm66, %v90, %v94
    %v100 = vsel %vm67, %v90, %v94
    %v101 = vsel %vm68, %v90, %v94
    %v102 = vsel %vm69, %v90, %v94
    %v103 = vsel %vm70, %v90, %v94
    %v104 = vsel %vm71, %v90, %v94
    %v105 = vsel %vm72, %v90, %v94
    %v106 = vsel %vm73, %v90, %v94
    %v107 = vsel %vm74, %v90, %v94
    %v108 = vsel %vm75, %v90, %v94
    %v109 = vsel %vm76, %v90, %v94
    %v110 = vsel %vm77, %v90, %v94
    %v111 = vsel %vm78, %v90, %v94
    %v112 = vsel %vm79, %v90, %v94
    %v113 = vsel %vm80, %v90, %v94
    %v114 = vsel %vm81, %v90, %v94
    %v115 = vsel %vm82, %v90, %v94
    %v116 = vsel %vm83, %v90, %v94
    %v117 = vsel %vm84, %v90, %v94
    %v118 = vsel %vm85, %v90, %v94
    %vm119 = vcmp.eq.s32.totalorder %v38, %v95
    %vm120 = vcmp.eq.s32.totalorder %v39, %v96
    %vm121 = vcmp.eq.s32.totalorder %v40, %v97
    %vm122 = vcmp.eq.s32.totalorder %v41, %v98
    %vm123 = vcmp.eq.s32.totalorder %v42, %v99
    %vm124 = vcmp.eq.s32.totalorder %v43, %v100
    %vm125 = vcmp.eq.s32.totalorder %v44, %v101
    %vm126 = vcmp.eq.s32.totalorder %v45, %v102
    %vm127 = vcmp.eq.s32.totalorder %v46, %v103
    %vm128 = vcmp.eq.s32.totalorder %v47, %v104
    %vm129 = vcmp.eq.s32.totalorder %v48, %v105
    %vm130 = vcmp.eq.s32.totalorder %v49, %v106
    %vm131 = vcmp.eq.s32.totalorder %v50, %v107
    %vm132 = vcmp.eq.s32.totalorder %v51, %v108
    %vm133 = vcmp.eq.s32.totalorder %v52, %v109
    %vm134 = vcmp.eq.s32.totalorder %v53, %v110
    %vm135 = vcmp.eq.s32.totalorder %v54, %v111
    %vm136 = vcmp.eq.s32.totalorder %v55, %v112
    %vm137 = vcmp.eq.s32.totalorder %v56, %v113
    %vm138 = vcmp.eq.s32.totalorder %v57, %v114
    %vm139 = vcmp.eq.s32.totalorder %v58, %v115
    %vm140 = vcmp.eq.s32.totalorder %v59, %v116
    %vm141 = vcmp.eq.s32.totalorder %v60, %v117
    %vm142 = vcmp.eq.s32.totalorder %v61, %v118
    %v143 = vsel %vm119, 1, 0
    %v144 = vsel %vm120, 1, 0
    %v145 = vsel %vm121, 1, 0
    %v146 = vsel %vm122, 1, 0
    %v147 = vsel %vm123, 1, 0
    %v148 = vsel %vm124, 1, 0
    %v149 = vsel %vm125, 1, 0
    %v150 = vsel %vm126, 1, 0
    %v151 = vsel %vm127, 1, 0
    %v152 = vsel %vm128, 1, 0
    %v153 = vsel %vm129, 1, 0
    %v154 = vsel %vm130, 1, 0
    %v155 = vsel %vm131, 1, 0
    %v156 = vsel %vm132, 1, 0
    %v157 = vsel %vm133, 1, 0
    %v158 = vsel %vm134, 1, 0
    %v159 = vsel %vm135, 1, 0
    %v160 = vsel %vm136, 1, 0
    %v161 = vsel %vm137, 1, 0
    %v162 = vsel %vm138, 1, 0
    %v163 = vsel %vm139, 1, 0
    %v164 = vsel %vm140, 1, 0
    %v165 = vsel %vm141, 1, 0
    %v166 = vsel %vm142, 1, 0
    %v167 = vcvt.s32.f32 %v143
    %v168 = vcvt.s32.f32 %v144
    %v169 = vcvt.s32.f32 %v145
    %v170 = vcvt.s32.f32 %v146
    %v171 = vcvt.s32.f32 %v147
    %v172 = vcvt.s32.f32 %v148
    %v173 = vcvt.s32.f32 %v149
    %v174 = vcvt.s32.f32 %v150
    %v175 = vcvt.s32.f32 %v151
    %v176 = vcvt.s32.f32 %v152
    %v177 = vcvt.s32.f32 %v153
    %v178 = vcvt.s32.f32 %v154
    %v179 = vcvt.s32.f32 %v155
    %v180 = vcvt.s32.f32 %v156
    %v181 = vcvt.s32.f32 %v157
    %v182 = vcvt.s32.f32 %v158
    %v183 = vcvt.s32.f32 %v159
    %v184 = vcvt.s32.f32 %v160
    %v185 = vcvt.s32.f32 %v161
    %v186 = vcvt.s32.f32 %v162
    %v187 = vcvt.s32.f32 %v163
    %v188 = vcvt.s32.f32 %v164
    %v189 = vcvt.s32.f32 %v165
    %v190 = vcvt.s32.f32 %v166
    %v191 = vld [vmem:[#allocation2] sm:$0xff]
    %v192 = vld [vmem:[#allocation2 + $0x8] sm:$0xff]
    %v193 = vld [vmem:[#allocation2 + $0x10] sm:$0xff]
    %v194 = vld [vmem:[#allocation2 + $0x18] sm:$0xff]
    %v195 = vld [vmem:[#allocation2 + $0x20] sm:$0xff]
    %v196 = vld [vmem:[#allocation2 + $0x28] sm:$0xff]
    %v197 = vld [vmem:[#allocation2 + $0x30] sm:$0xff]
    %v198 = vld [vmem:[#allocation2 + $0x38] sm:$0xff]
    %v199 = vld [vmem:[#allocation2 + $0x40] sm:$0xff]
    %v200 = vld [vmem:[#allocation2 + $0x48] sm:$0xff]
    %v201 = vld [vmem:[#allocation2 + $0x50] sm:$0xff]
    %v202 = vld [vmem:[#allocation2 + $0x58] sm:$0xff]
    %v203 = vld [vmem:[#allocation2 + $0x60] sm:$0xff]
    %v204 = vld [vmem:[#allocation2 + $0x68] sm:$0xff]
    %v205 = vld [vmem:[#allocation2 + $0x70] sm:$0xff]
    %v206 = vld [vmem:[#allocation2 + $0x78] sm:$0xff]
    %vm207 = vcmask 523264
    %v209 = vsel %vm207, %v192, 0
    %v212 = vsel %vm207, %v194, 0
    %v215 = vsel %vm207, %v196, 0
    %v218 = vsel %vm207, %v198, 0
    %v221 = vsel %vm207, %v200, 0
    %v224 = vsel %vm207, %v202, 0
    %v227 = vsel %vm207, %v204, 0
    %v230 = vsel %vm207, %v206, 0
    %232 = vmatprep.subr.mxu0 0.0
    %233 = vmatpush1.msra.mxu0 %v167
    %234 = vmatprep.subr.mxu0 0.0
    %235 = vmatpush1.msra.mxu0 %v168
    %236 = vmatprep.subr.mxu0 0.0
    %237 = vmatpush1.msra.mxu0 %v169
    %238 = vmatprep.subr.mxu0 0.0
    %239 = vmatpush1.msra.mxu0 %v170
    %240 = vmatprep.subr.mxu0 0.0
    %241 = vmatpush1.msra.mxu0 %v171
    %242 = vmatprep.subr.mxu0 0.0
    %243 = vmatpush1.msra.mxu0 %v172
    %244 = vmatprep.subr.mxu0 0.0
    %245 = vmatpush1.msra.mxu0 %v173
    %246 = vmatprep.subr.mxu0 0.0
    %247 = vmatpush1.msra.mxu0 %v174
    %248 = vmatprep.subr.mxu0 0.0
    %249 = vmatpush1.msra.mxu0 %v175
    %250 = vmatprep.subr.mxu0 0.0
    %251 = vmatpush1.msra.mxu0 %v176
    %252 = vmatprep.subr.mxu0 0.0
    %253 = vmatpush1.msra.mxu0 %v177
    %254 = vmatprep.subr.mxu0 0.0
    %255 = vmatpush1.msra.mxu0 %v178
    %256 = vmatprep.subr.mxu0 0.0
    %257 = vmatpush1.msra.mxu0 %v179
    %258 = vmatprep.subr.mxu0 0.0
    %259 = vmatpush1.msra.mxu0 %v180
    %260 = vmatprep.subr.mxu0 0.0
    %261 = vmatpush1.msra.mxu0 %v181
    %262 = vmatprep.subr.mxu0 0.0
    %263 = vmatpush1.msra.mxu0 %v182
    %264 = vmatprep.subr.mxu0 0.0
    %265 = vmatpush1.msra.mxu0 %v183
    %266 = vmatprep.subr.mxu0 0.0
    %267 = vmatpush1.msra.mxu0 %v184
    %268 = vmatprep.subr.mxu0 0.0
    %269 = vmatpush1.msra.mxu0 %v185
    %270 = vmatprep.subr.mxu0 0.0
    %271 = vmatpush1.msra.mxu0 %v186
    %272 = vmatprep.subr.mxu0 0.0
    %273 = vmatpush1.msra.mxu0 %v187
    %274 = vmatprep.subr.mxu0 0.0
    %275 = vmatpush1.msra.mxu0 %v188
    %276 = vmatprep.subr.mxu0 0.0
    %277 = vmatpush1.msra.mxu0 %v189
    %278 = vmatprep.subr.mxu0 0.0
    %279 = vmatpush1.msra.mxu0 %v190
    %280 = vmatprep.subr.mxu0 0.0
    %281 = vmatpush1.msra.mxu0 0.0
    %282 = vmatprep.subr.mxu0 0.0
    %283 = vmatpush1.msra.mxu0 0.0
    %284 = vmatprep.subr.mxu0 0.0
    %285 = vmatpush1.msra.mxu0 0.0
    %286 = vmatprep.subr.mxu0 0.0
    %287 = vmatpush1.msra.mxu0 0.0
    %288 = vmatprep.subr.mxu0 0.0
    %289 = vmatpush1.msra.mxu0 0.0
    %290 = vmatprep.subr.mxu0 0.0
    %291 = vmatpush1.msra.mxu0 0.0
    %292 = vmatprep.subr.mxu0 0.0
    %293 = vmatpush1.msra.mxu0 0.0
    %294 = vmatprep.subr.mxu0 0.0
    %295 = vmatpush1.msra.mxu0 0.0
    %296 = vmatprep.mubr.f32.mxu0 %v209
    %297 = vmatmul.mubr.f32.gmra.mrb[0].mxu0 %v191
    %v298 = vpop.f32.mrb[0].mxu0
    %v299 = vadd.f32 0.0, %v298
    %v300 = vpop.f32.mrb[0].mxu0
    %301 = vmatprep.mubr.f32.mxu0 %v212
    %302 = vmatmul.mubr.f32.gmra.mrb[0].mxu0 %v193
    %v303 = vpop.f32.mrb[0].mxu0
    %v304 = vadd.f32 0.0, %v303
    %v305 = vpop.f32.mrb[0].mxu0
    %306 = vmatprep.mubr.f32.mxu0 %v215
    %307 = vmatmul.mubr.f32.gmra.mrb[0].mxu0 %v195
    %v308 = vpop.f32.mrb[0].mxu0
    %v309 = vadd.f32 0.0, %v308
    %v310 = vpop.f32.mrb[0].mxu0
    %311 = vmatprep.mubr.f32.mxu0 %v218
    %312 = vmatmul.mubr.f32.gmra.mrb[0].mxu0 %v197
    %v313 = vpop.f32.mrb[0].mxu0
    %v314 = vadd.f32 0.0, %v313
    %v315 = vpop.f32.mrb[0].mxu0
    %316 = vmatprep.mubr.f32.mxu0 %v221
    %317 = vmatmul.mubr.f32.gmra.mrb[0].mxu0 %v199
    %v318 = vpop.f32.mrb[0].mxu0
    %v319 = vadd.f32 0.0, %v318
    %v320 = vpop.f32.mrb[0].mxu0
    %321 = vmatprep.mubr.f32.mxu0 %v224
    %322 = vmatmul.mubr.f32.gmra.mrb[0].mxu0 %v201
    %v323 = vpop.f32.mrb[0].mxu0
    %v324 = vadd.f32 0.0, %v323
    %v325 = vpop.f32.mrb[0].mxu0
    %326 = vmatprep.mubr.f32.mxu0 %v227
    %327 = vmatmul.mubr.f32.gmra.mrb[0].mxu0 %v203
    %v328 = vpop.f32.mrb[0].mxu0
    %v329 = vadd.f32 0.0, %v328
    %v330 = vpop.f32.mrb[0].mxu0
    %331 = vmatprep.mubr.f32.mxu0 %v230
    %332 = vmatmul.mubr.f32.gmra.mrb[0].mxu0 %v205
    %v333 = vpop.f32.mrb[0].mxu0
    %v334 = vadd.f32 0.0, %v333
    %v335 = vpop.f32.mrb[0].mxu0
    %336 = vdwg.mxu0
    %v337 = vmul.f32 %v299, %v319
    %v338 = vmul.f32 %v304, %v324
    %v339 = vmul.f32 %v309, %v329
    %v340 = vmul.f32 %v314, %v334
    %v341 = vld [vmem:[%s3] sm:$0xff]
    %v342 = vld [vmem:[%s4] sm:$0xff]
    %344 = vset.pattern.permute.xlu0 0
    %345 = vperm.xlu0 %344, %v342
    %v346 = vpop.permute.xlu0 %345
    %vm348 = vcmask 261120
    %v350 = vsel %vm348, %v341, 0
    %352 = vmatprep.subr.mxu0 0.0
    %353 = vmatpush1.msra.mxu0 %v337
    %354 = vmatprep.subr.mxu0 0.0
    %355 = vmatpush1.msra.mxu0 %v338
    %356 = vmatprep.subr.mxu0 0.0
    %357 = vmatpush1.msra.mxu0 %v339
    %358 = vmatprep.subr.mxu0 0.0
    %359 = vmatpush1.msra.mxu0 %v340
    %360 = vmatprep.subr.mxu0 0.0
    %361 = vmatpush1.msra.mxu0 0.0
    %362 = vmatprep.subr.mxu0 0.0
    %363 = vmatpush1.msra.mxu0 0.0
    %364 = vmatprep.subr.mxu0 0.0
    %365 = vmatpush1.msra.mxu0 0.0
    %366 = vmatprep.subr.mxu0 0.0
    %367 = vmatpush1.msra.mxu0 0.0
    %368 = vmatprep.subr.mxu0 0.0
    %369 = vmatpush1.msra.mxu0 0.0
    %370 = vmatprep.subr.mxu0 0.0
    %371 = vmatpush1.msra.mxu0 0.0
    %372 = vmatprep.subr.mxu0 0.0
    %373 = vmatpush1.msra.mxu0 0.0
    %374 = vmatprep.subr.mxu0 0.0
    %375 = vmatpush1.msra.mxu0 0.0
    %376 = vmatprep.subr.mxu0 0.0
    %377 = vmatpush1.msra.mxu0 0.0
    %378 = vmatprep.subr.mxu0 0.0
    %379 = vmatpush1.msra.mxu0 0.0
    %380 = vmatprep.subr.mxu0 0.0
    %381 = vmatpush1.msra.mxu0 0.0
    %382 = vmatprep.subr.mxu0 0.0
    %383 = vmatpush1.msra.mxu0 0.0
    %384 = vmatprep.subr.mxu0 0.0
    %385 = vmatpush1.msra.mxu0 0.0
    %386 = vmatprep.subr.mxu0 0.0
    %387 = vmatpush1.msra.mxu0 0.0
    %388 = vmatprep.subr.mxu0 0.0
    %389 = vmatpush1.msra.mxu0 0.0
    %390 = vmatprep.subr.mxu0 0.0
    %391 = vmatpush1.msra.mxu0 0.0
    %392 = vmatprep.subr.mxu0 0.0
    %393 = vmatpush1.msra.mxu0 0.0
    %394 = vmatprep.subr.mxu0 0.0
    %395 = vmatpush1.msra.mxu0 0.0
    %396 = vmatprep.subr.mxu0 0.0
    %397 = vmatpush1.msra.mxu0 0.0
    %398 = vmatprep.subr.mxu0 0.0
    %399 = vmatpush1.msra.mxu0 0.0
    %400 = vmatprep.subr.mxu0 0.0
    %401 = vmatpush1.msra.mxu0 0.0
    %402 = vmatprep.subr.mxu0 0.0
    %403 = vmatpush1.msra.mxu0 0.0
    %404 = vmatprep.subr.mxu0 0.0
    %405 = vmatpush1.msra.mxu0 0.0
    %406 = vmatprep.subr.mxu0 0.0
    %407 = vmatpush1.msra.mxu0 0.0
    %408 = vmatprep.subr.mxu0 0.0
    %409 = vmatpush1.msra.mxu0 0.0
    %410 = vmatprep.subr.mxu0 0.0
    %411 = vmatpush1.msra.mxu0 0.0
    %412 = vmatprep.subr.mxu0 0.0
    %413 = vmatpush1.msra.mxu0 0.0
    %414 = vmatprep.subr.mxu0 0.0
    %415 = vmatpush1.msra.mxu0 0.0
    %416 = vmatprep.mubr.f32.mxu0 0.0
    %417 = vmatmul.mubr.f32.gmra.mrb[0].mxu0 %v350
    %v418 = vpop.f32.mrb[0].mxu0
    %v419 = vadd.f32 %v346, %v418
    %v420 = vpop.f32.mrb[0].mxu0
    %421 = vdwg.mxu0
    %422 = vst [vmem:[#allocation5] sm:$0xff] %v419
    // Predicated region
    $region26: #{tpu_custom_call.1} parent=1 // pred_check
      _
    $region27: #{tpu_custom_call.1} parent=1 // pred_check_branch
      %424 = sbr.rel (0) target = $region29
    $region28: #{tpu_custom_call.1} parent=1 // pred_region
      %s426 = ssub.s32 128, 128
      %427 = vsyncadd [#allocation4], %s426
      %s429 = sshll.u32 [#allocation5], 4
      %s430 = int_to_ptr.vmem [resolvable:$true] %s429
      %432 = dma.vmem_to_hbm [thread:$0]  %s430, 128, %s5, [#allocation4]
    $region29: #{tpu_custom_call.1} parent=1 // pred_fallthru
      _
    // Predicated region
    $region30: #{tpu_custom_call.1} parent=1 // pred_check
      _
    $region31: #{tpu_custom_call.1} parent=1 // pred_check_branch
      %434 = sbr.rel (0) target = $region33
    $region32: #{tpu_custom_call.1} parent=1 // pred_region
      %435 = dma.done [#allocation4], 128
    $region33: #{tpu_custom_call.1} parent=1 // pred_fallthru
      _
    %436 = vsyncpa [#allocation3], 1
    %437 = vsyncpa [#allocation4], 1

</llo_original>
